<compile_context>
chip_gen: v5e
topology: v5e:2x2
jax: 0.10.0
libtpu: 0.0.40
codegen_flags: <defaults>
</compile_context>

<pallas_src>
import functools

import jax
import jax.numpy as jnp
from jax.experimental import pallas as pl
from jax.experimental.pallas import tpu as pltpu

_LANES = 128
_SUBLANES = 8
# ~4 MiB of input data per grid step per tensor (itemsize-scaled below).
_TARGET_TILE_BYTES = 4 * 1024 * 1024


def _round_up(x, m):
    return (x + m - 1) // m * m


def _mse_kernel(pred_ref, real_ref, out_ref, *,
                block_rows, blocks_per_split, total_rows):
    # pred_ref / real_ref: (block_rows, 128) VMEM tiles in their native dtype.
    # out_ref: (1, 8, 128) f32 per-split partial-sum accumulator (persists
    #          across the inner k axis because its block index only depends
    #          on the split index p).
    p = pl.program_id(0)
    k = pl.program_id(1)

    @pl.when(k == 0)
    def _():
        out_ref[...] = jnp.zeros_like(out_ref)

    # Load native dtype, compute & accumulate in f32.
    d = real_ref[...].astype(jnp.float32) - pred_ref[...].astype(jnp.float32)
    sq = d * d

    # Mask rows that fall beyond the true row count: the partial edge block,
    # and (for an odd total block count) the duplicated, clamped trailing
    # block of the last split.  Cheap VPU work, hidden under the input DMA.
    start_row = (p * blocks_per_split + k) * block_rows
    row_ids = start_row + jax.lax.broadcasted_iota(
        jnp.int32, (block_rows, _LANES), 0)
    sq = jnp.where(row_ids < total_rows, sq, 0.0)

    if block_rows % _SUBLANES == 0:
        # Fold the row block onto one vreg-shaped (8, 128) partial: the
        # reshape only splits the row-major leading dim (layout-free) and the
        # sum over axis 0 is a pure VPU add chain.
        out_ref[0, :, :] += jnp.sum(
            sq.reshape(block_rows // _SUBLANES, _SUBLANES, _LANES), axis=0)
    else:
        # Tiny single-block inputs (rows < 8 or ragged full-dim block).
        out_ref[0, 0:1, :] += jnp.sum(sq, axis=0, keepdims=True)


def mse_loss(pred, real, *, target_tile_bytes=_TARGET_TILE_BYTES):
    """Pallas TPU implementation of MSE.forward(pred, real)."""
    assert pred.shape == real.shape, "pred/real must have the same shape"
    n = pred.size
    assert n > 0

    # Flatten in native dtype (no HBM up-cast; cast happens in-kernel).
    pred_f = jnp.ravel(pred)
    real_f = jnp.ravel(real)

    # Pad only the last partial 128-lane row (<=127 zeros in BOTH tensors, so
    # padded diffs are exactly zero and the sum of squares is unchanged).
    n_pad = _round_up(n, _LANES)
    if n_pad != n:
        pred_f = jnp.pad(pred_f, (0, n_pad - n))
        real_f = jnp.pad(real_f, (0, n_pad - n))

    rows = n_pad // _LANES
    pred2d = pred_f.reshape(rows, _LANES)
    real2d = real_f.reshape(rows, _LANES)

    # Tile sizing: keep bytes-per-step roughly constant across dtypes.
    itemsize = max(pred_f.dtype.itemsize, real_f.dtype.itemsize)
    cap = max(_SUBLANES,
              (target_tile_bytes // (_LANES * itemsize)) // _SUBLANES * _SUBLANES)
    block_rows = min(cap, rows)          # == rows (full dim) for small inputs
    total_blocks = pl.cdiv(rows, block_rows)
    n_splits = 2 if total_blocks >= 2 else 1
    blocks_per_split = pl.cdiv(total_blocks, n_splits)
    last_block = total_blocks - 1

    kernel = functools.partial(
        _mse_kernel,
        block_rows=block_rows,
        blocks_per_split=blocks_per_split,
        total_rows=rows,
    )

    # Clamp the block index so the (at most one) trailing grid step of the
    # last split never issues a fully out-of-bounds DMA; its (duplicated)
    # contribution is zeroed by the in-kernel row mask.
    def in_index(p, k):
        return (jnp.minimum(p * blocks_per_split + k, last_block), 0)

    in_spec = pl.BlockSpec((block_rows, _LANES), in_index)

    partials = pl.pallas_call(
        kernel,
        out_shape=jax.ShapeDtypeStruct((n_splits, _SUBLANES, _LANES),
                                       jnp.float32),
        grid_spec=pltpu.PrefetchScalarGridSpec(
            num_scalar_prefetch=0,
            grid=(n_splits, blocks_per_split),
            in_specs=[in_spec, in_spec],
            out_specs=pl.BlockSpec((1, _SUBLANES, _LANES),
                                   lambda p, k: (p, 0, 0)),
        ),
        compiler_params=pltpu.CompilerParams(
            dimension_semantics=("parallel", "arbitrary"),
            vmem_limit_bytes=32 * 1024 * 1024,
        ),
    )(pred2d, real2d)

    # Tiny final reduce + divide in XLA; PyTorch returns a 0-dim scalar.
    return jnp.sum(partials) / n


if __name__ == "__main__":
    key = jax.random.PRNGKey(0)
    k1, k2 = jax.random.split(key)

    # 1) Small NCHW-like activations (student prediction vs teacher target).
    #    numel is a multiple of 128 -> zero wrapper padding, single block.
    pred = jax.random.normal(k1, (2, 4, 16, 16), dtype=jnp.float32)
    real = jax.random.normal(k2, (2, 4, 16, 16), dtype=jnp.float32)
    mse = mse_loss(pred, real)
    jax.block_until_ready(mse)
    ref = jnp.sum((real - pred) ** 2) / pred.size
    assert jnp.allclose(mse, ref, rtol=1e-5, atol=1e-6), (mse, ref)

    # 2) Odd size + bf16 inputs: exercises the <=127-element lane pad and the
    #    native-dtype HBM / in-kernel f32 compute path.
    p16 = jax.random.normal(k1, (3, 5, 7), dtype=jnp.float32).astype(jnp.bfloat16)
    r16 = jax.random.normal(k2, (3, 5, 7), dtype=jnp.float32).astype(jnp.bfloat16)
    mse16 = mse_loss(p16, r16)
    jax.block_until_ready(mse16)
    ref16 = jnp.sum(
        (r16.astype(jnp.float32) - p16.astype(jnp.float32)) ** 2
    ) / p16.size
    assert jnp.allclose(mse16, ref16, rtol=1e-3, atol=1e-5), (mse16, ref16)

    # 3) Force tiny tiles to exercise the multi-block / 2-split path, the
    #    ragged-row in-kernel mask, and the clamped (fully masked) trailing
    #    block of the second split -- all with a small deterministic input.
    p3 = jax.random.normal(k1, (17, 128), dtype=jnp.float32)
    r3 = jax.random.normal(k2, (17, 128), dtype=jnp.float32)
    mse3 = mse_loss(p3, r3, target_tile_bytes=_SUBLANES * _LANES * 4)
    jax.block_until_ready(mse3)
    ref3 = jnp.sum((r3 - p3) ** 2) / p3.size
    assert jnp.allclose(mse3, ref3, rtol=1e-5, atol=1e-6), (mse3, ref3)

    print("KERNEL_OK")
</pallas_src>

<mosaic_0001>
module attributes {stable_mosaic.version = 11 : i64} {
  func.func @_mse_kernel(%arg0: i32, %arg1: i32, %arg2: memref<16x128xf32, #tpu.memory_space<vmem>>, %arg3: memref<16x128xf32, #tpu.memory_space<vmem>>, %arg4: memref<1x8x128xf32, #tpu.memory_space<vmem>>) attributes {dimension_semantics = [#tpu.dimension_semantics<parallel>, #tpu.dimension_semantics<arbitrary>], iteration_bounds = array<i64: 1, 1>, scalar_prefetch = 0 : i64, scratch_operands = 0 : i64, tpu.core_type = #tpu.core_type<tc>, window_params = [{transform_indices = @transform_0, window_bounds = array<i64: 16, 128>}, {transform_indices = @transform_1, window_bounds = array<i64: 16, 128>}, {transform_indices = @transform_2, window_bounds = array<i64: 1, 8, 128>}]} {
    %c0_i32 = arith.constant 0 : i32
    %0 = arith.cmpi eq, %arg1, %c0_i32 : i32
    %1 = arith.extui %0 : i1 to i32
    %c0_i32_0 = arith.constant 0 : i32
    %2 = arith.cmpi ne, %1, %c0_i32_0 : i32
    scf.if %2 {
      %cst_12 = arith.constant 0.000000e+00 : f32
      %25 = vector.broadcast %cst_12 : f32 to vector<1x8x128xf32>
      %c0_13 = arith.constant 0 : index
      %c0_14 = arith.constant 0 : index
      %c0_15 = arith.constant 0 : index
      %26 = vector.load %arg4[%c0_13, %c0_14, %c0_15] : memref<1x8x128xf32, #tpu.memory_space<vmem>>, vector<1x8x128xf32>
      tpu.vector_store %arg4[%c0_13, %c0_14, %c0_15], %25 {strides = array<i32>} : memref<1x8x128xf32, #tpu.memory_space<vmem>>, vector<1x8x128xf32>,
    } else {
    }
    %c0 = arith.constant 0 : index
    %c0_1 = arith.constant 0 : index
    %3 = vector.load %arg3[%c0, %c0_1] : memref<16x128xf32, #tpu.memory_space<vmem>>, vector<16x128xf32>
    %c0_2 = arith.constant 0 : index
    %c0_3 = arith.constant 0 : index
    %4 = vector.load %arg2[%c0_2, %c0_3] : memref<16x128xf32, #tpu.memory_space<vmem>>, vector<16x128xf32>
    %5 = arith.subf %3, %4 : vector<16x128xf32>
    %6 = arith.mulf %5, %5 : vector<16x128xf32>
    %c1_i32 = arith.constant 1 : i32
    %7 = arith.muli %arg0, %c1_i32 : i32
    %8 = arith.addi %7, %arg1 : i32
    %c16_i32 = arith.constant 16 : i32
    %9 = arith.muli %8, %c16_i32 : i32
    %10 = tpu.iota {dimensions = array<i32: 0>} : vector<16x128xi32>
    %11 = vector.broadcast %9 : i32 to vector<16x128xi32>
    %12 = arith.addi %11, %10 : vector<16x128xi32>
    %c16_i32_4 = arith.constant 16 : i32
    %13 = vector.broadcast %c16_i32_4 : i32 to vector<16x128xi32>
    %14 = arith.cmpi slt, %12, %13 : vector<16x128xi32>
    %cst = arith.constant 0.000000e+00 : f32
    %15 = vector.broadcast %cst : f32 to vector<16x128xf32>
    %16 = arith.select %14, %6, %15 : vector<16x128xi1>, vector<16x128xf32>
    %c0_5 = arith.constant 0 : index
    %c0_6 = arith.constant 0 : index
    %c0_7 = arith.constant 0 : index
    %17 = vector.load %arg4[%c0_5, %c0_6, %c0_7] : memref<1x8x128xf32, #tpu.memory_space<vmem>>, vector<1x8x128xf32>
    %18 = vector.shape_cast %17 : vector<1x8x128xf32> to vector<8x128xf32>
    %19 = vector.shape_cast %16 : vector<16x128xf32> to vector<2x8x128xf32>
    %cst_8 = arith.constant dense<0.000000e+00> : vector<8x128xf32>
    %20 = vector.multi_reduction <add>, %19, %cst_8 [0] : vector<2x8x128xf32> to vector<8x128xf32>
    %21 = arith.addf %18, %20 : vector<8x128xf32>
    %c0_9 = arith.constant 0 : index
    %c0_10 = arith.constant 0 : index
    %c0_11 = arith.constant 0 : index
    %22 = vector.load %arg4[%c0_9, %c0_10, %c0_11] : memref<1x8x128xf32, #tpu.memory_space<vmem>>, vector<1x8x128xf32>
    %23 = vector.shape_cast %22 : vector<1x8x128xf32> to vector<8x128xf32>
    %24 = vector.shape_cast %21 : vector<8x128xf32> to vector<1x8x128xf32>
    tpu.vector_store %arg4[%c0_9, %c0_10, %c0_11], %24 {strides = array<i32>} : memref<1x8x128xf32, #tpu.memory_space<vmem>>, vector<1x8x128xf32>,
    return
  }
  func.func @transform_0(%arg0: i32, %arg1: i32) -> (i32, i32) {
    %c1_i32 = arith.constant 1 : i32
    %0 = arith.muli %arg0, %c1_i32 : i32
    %1 = arith.addi %0, %arg1 : i32
    %c0_i32 = arith.constant 0 : i32
    %2 = arith.minsi %1, %c0_i32 : i32
    %c0_i32_0 = arith.constant 0 : i32
    %c0_i32_1 = arith.constant 0 : i32
    return %2, %c0_i32_0 : i32, i32
  }
  func.func @transform_1(%arg0: i32, %arg1: i32) -> (i32, i32) {
    %c1_i32 = arith.constant 1 : i32
    %0 = arith.muli %arg0, %c1_i32 : i32
    %1 = arith.addi %0, %arg1 : i32
    %c0_i32 = arith.constant 0 : i32
    %2 = arith.minsi %1, %c0_i32 : i32
    %c0_i32_0 = arith.constant 0 : i32
    %c0_i32_1 = arith.constant 0 : i32
    return %2, %c0_i32_0 : i32, i32
  }
  func.func @transform_2(%arg0: i32, %arg1: i32) -> (i32, i32, i32) {
    %c0_i32 = arith.constant 0 : i32
    %c0_i32_0 = arith.constant 0 : i32
    %c0_i32_1 = arith.constant 0 : i32
    return %arg0, %c0_i32, %c0_i32_0 : i32, i32, i32
  }
}

</mosaic_0001>

<llo_original>
// kernel: tpu_custom_call.1
$region0: #{tpu_custom_call.1}
  #allocation0 [shape = 'u32[]', space=smem, size = 0x4, offset = 0x4, fixed_abs, tag = 'smem constant byte address 0x4 - core index']
  #allocation1 [shape = 'u32[72,128]{1,0:T(1,128)}', space=vmem, size = 0x9000, scoped, tag = 'internal scratch']
  %s0 = inlined_call_operand.hbm [shape: f32[16,128], index: 0, kind: input, shape index: {}]
  %s1 = inlined_call_operand.hbm [shape: f32[16,128], index: 1, kind: input, shape index: {}]
  %s2 = inlined_call_operand.hbm [shape: f32[1,8,128], index: 2, kind: output, shape index: {}]
  %s3 = sld [smem:[#allocation0]]
  $region30: #{tpu_custom_call.1} parent=0
    _
  %s5 = ssub.s32 1, %s3
  %s6 = scalar_select 0, %s5, %s3
  $region1: #{tpu_custom_call.1} parent=0
    #allocation2 [shape = 'u8[8192]{0}', space=vmem, size = 0x2000, scoped, tag = 'input window, operand 0, single buffered']
    #allocation3 [shape = 's32[1]{0}', space=sflag, size = 0x4, scoped, tag = 'scoped memory for tpu_custom_call.1']
    #allocation4 [shape = 's32[1]{0}', space=sflag, size = 0x4, scoped, tag = 'scoped memory for tpu_custom_call.1']
    #allocation5 [shape = 'u8[8192]{0}', space=vmem, size = 0x2000, scoped, tag = 'input window, operand 1, single buffered']
    #allocation6 [shape = 's32[1]{0}', space=sflag, size = 0x4, scoped, tag = 'scoped memory for tpu_custom_call.1']
    #allocation7 [shape = 'u8[4096]{0}', space=vmem, size = 0x1000, scoped, tag = 'output window, operand 0, single buffered']
    %7 = vsyncpa [#allocation3], 0
    %8 = vsyncpa [#allocation6], 0
    %9 = vsyncpa [#allocation4], 0
    // Predicated region
    $region2: #{tpu_custom_call.1} parent=1 // pred_check
      _
    $region3: #{tpu_custom_call.1} parent=1 // pred_check_branch
      %11 = sbr.rel (0) target = $region5
    $region4: #{tpu_custom_call.1} parent=1 // pred_region
      %s12 = sadd.s32 0, 0
      %p13 = scmp.lt.s32.totalorder %s12, 0
      %s14 = scalar_select %p13, %s12, 0
      %s15 = smul.u32 2, %s14
      %17 = vsyncadd [#allocation3], 0
      %s18 = smul.addr %s15, 8
      %s19 = scalar_lea.hbm %s0, %s18
      %s20 = sshll.u32 %s19, 4
      %s21 = int_to_ptr.hbm [resolvable:$true] %s20
      %s22 = sshll.u32 [#allocation2], 4
      %s23 = int_to_ptr.vmem [resolvable:$true] %s22
      %28 = dma.hbm_to_vmem [thread:$0]  %s21, 256, %s23, [#allocation3], 128, 128, 8
    $region5: #{tpu_custom_call.1} parent=1 // pred_fallthru
      _
    // Predicated region
    $region6: #{tpu_custom_call.1} parent=1 // pred_check
      _
    $region7: #{tpu_custom_call.1} parent=1 // pred_check_branch
      %30 = sbr.rel (0) target = $region9
    $region8: #{tpu_custom_call.1} parent=1 // pred_region
      %s31 = sadd.s32 0, 0
      %p32 = scmp.lt.s32.totalorder %s31, 0
      %s33 = scalar_select %p32, %s31, 0
      %s34 = smul.u32 2, %s33
      %36 = vsyncadd [#allocation6], 0
      %s37 = smul.addr %s34, 8
      %s38 = scalar_lea.hbm %s1, %s37
      %s39 = sshll.u32 %s38, 4
      %s40 = int_to_ptr.hbm [resolvable:$true] %s39
      %s41 = sshll.u32 [#allocation5], 4
      %s42 = int_to_ptr.vmem [resolvable:$true] %s41
      %47 = dma.hbm_to_vmem [thread:$0]  %s40, 256, %s42, [#allocation6], 128, 128, 8
    $region9: #{tpu_custom_call.1} parent=1 // pred_fallthru
      _
    // Predicated region
    $region10: #{tpu_custom_call.1} parent=1 // pred_check
      _
    $region11: #{tpu_custom_call.1} parent=1 // pred_check_branch
      %49 = sbr.rel (0) target = $region13
    $region12: #{tpu_custom_call.1} parent=1 // pred_region
      %51 = dma.done [#allocation3], 256
    $region13: #{tpu_custom_call.1} parent=1 // pred_fallthru
      _
    // Predicated region
    $region14: #{tpu_custom_call.1} parent=1 // pred_check
      _
    $region15: #{tpu_custom_call.1} parent=1 // pred_check_branch
      %53 = sbr.rel (0) target = $region17
    $region16: #{tpu_custom_call.1} parent=1 // pred_region
      %55 = dma.done [#allocation6], 256
    $region17: #{tpu_custom_call.1} parent=1 // pred_fallthru
      _
    %s56 = sadd.s32 0, 0
    %p57 = scmp.lt.s32.totalorder %s56, 0
    %s58 = scalar_select %p57, %s56, 0
    %s59 = smul.u32 2, %s58
    %s60 = sadd.s32 0, 0
    %p61 = scmp.lt.s32.totalorder %s60, 0
    %s62 = scalar_select %p61, %s60, 0
    %s63 = smul.u32 2, %s62
    %p64 = scmp.eq.s32.totalorder 0, 0
    // Predicated region
    $region18: #{tpu_custom_call.1} parent=1 // pred_check
      %p65 = pneg %p64
    $region19: #{tpu_custom_call.1} parent=1 // pred_check_branch
      %67 = sbr.rel (%p65) target = $region21
    $region20: #{tpu_custom_call.1} parent=1 // pred_region
      %68 = vst [vmem:[#allocation7] sm:$0xff] 0.0
    $region21: #{tpu_custom_call.1} parent=1 // pred_fallthru
      _
    %v69 = vld [vmem:[#allocation5] sm:$0xff]
    %v70 = vld [vmem:[#allocation5 + $0x8] sm:$0xff]
    %v71 = vld [vmem:[#allocation2] sm:$0xff]
    %v72 = vld [vmem:[#allocation2 + $0x8] sm:$0xff]
    %v73 = vsub.f32 %v69, %v71
    %v74 = vsub.f32 %v70, %v72
    %v75 = vmul.f32 %v73, %v73
    %v76 = vmul.f32 %v74, %v74
    %s77 = sadd.s32 0, 0
    %s78 = smul.u32 %s77, 16
    %v79 = vlaneseq
    %v80 = vshrl.u32 %v79, 7
    %v81 = vadd.s32 %v80, 8
    %v82 = vstv %s78
    %v83 = vadd.s32 %v82, %v80
    %v84 = vadd.s32 %v82, %v81
    %vm85 = vcmp.lt.s32.totalorder %v83, 16
    %vm86 = vcmp.lt.s32.totalorder %v84, 16
    %v87 = vsel %vm85, %v75, 0.0
    %v88 = vsel %vm86, %v76, 0.0
    %v89 = vld [vmem:[#allocation7] sm:$0xff]
    %v90 = vadd.f32 %v87, %v88
    %v91 = vadd.f32 %v89, %v90
    %92 = vst [vmem:[#allocation7] sm:$0xff] %v91
    // Predicated region
    $region22: #{tpu_custom_call.1} parent=1 // pred_check
      _
    $region23: #{tpu_custom_call.1} parent=1 // pred_check_branch
      %94 = sbr.rel (0) target = $region25
    $region24: #{tpu_custom_call.1} parent=1 // pred_region
      %96 = vsyncadd [#allocation4], 0
      %s98 = sshll.u32 [#allocation7], 4
      %s99 = int_to_ptr.vmem [resolvable:$true] %s98
      %s100 = sshll.u32 %s2, 4
      %s101 = int_to_ptr.hbm [resolvable:$true] %s100
      %103 = dma.vmem_to_hbm [thread:$0]  %s99, 128, %s101, [#allocation4]
    $region25: #{tpu_custom_call.1} parent=1 // pred_fallthru
      _
    // Predicated region
    $region26: #{tpu_custom_call.1} parent=1 // pred_check
      _
    $region27: #{tpu_custom_call.1} parent=1 // pred_check_branch
      %105 = sbr.rel (0) target = $region29
    $region28: #{tpu_custom_call.1} parent=1 // pred_region
      %107 = dma.done [#allocation4], 128
    $region29: #{tpu_custom_call.1} parent=1 // pred_fallthru
      _
    %108 = vsyncpa [#allocation3], 1
    %109 = vsyncpa [#allocation6], 1
    %110 = vsyncpa [#allocation4], 1

</llo_original>
